<compile_context>
chip_gen: v6e
topology: v6e:2x2x1
jax: 0.10.0
libtpu: 0.0.40
codegen_flags: <defaults>
</compile_context>

<pallas_src>
import math
from functools import partial

import jax
import jax.numpy as jnp
from jax.experimental import pallas as pl
from jax.experimental.pallas import tpu as pltpu


LANE = 128  # TPU lane width; output columns are padded to this for dense vst.


# ----------------------------- Pallas kernel ------------------------------- #
def _selfonn_kernel(p_ref, w_ref, b_ref, o_ref, *, q, mxu_dtype):
    # p_ref: (TM, K0)          patch rows (im2col)                   VMEM
    # w_ref: (q*K0, Cout_pad)  reshaped + lane-padded weight         VMEM (grid-invariant)
    # b_ref: (1, Cout_pad)     lane-padded bias                      VMEM (grid-invariant)
    # o_ref: (TM, Cout_pad)    output rows (lane-dense)              VMEM
    x = p_ref[...].astype(jnp.float32)

    # Elementwise power chain in f32 on the VPU (q is small and static).
    powers = [x]
    xp = x
    for _ in range(1, q):
        xp = xp * x
        powers.append(xp)
    xq = powers[0] if q == 1 else jnp.concatenate(powers, axis=-1)  # (TM, q*K0)

    w = w_ref[...]
    if mxu_dtype is not None:           # optional narrow MXU operands (v6e/v7x)
        xq = xq.astype(mxu_dtype)
        w = w.astype(mxu_dtype)

    # Single fused MXU matmul over the full q*K0 contraction depth.
    acc = jnp.dot(xq, w, preferred_element_type=jnp.float32)
    acc = acc + b_ref[...].astype(jnp.float32)
    o_ref[...] = acc.astype(o_ref.dtype)


# ------------------------------ JAX glue ------------------------------------ #
def _im2col(x, kernel_size, stride, padding, dilation):
    """x: [N, C, H, W] -> patches [N*Hout*Wout, C*kH*kW] (zero padding)."""
    # TODO(synk): fuse im2col into the kernel (haloed slab DMA via pl.ANY +
    # make_async_copy) to remove the ~kH*kW x patch-matrix HBM inflation.
    N, C, H, W = x.shape
    kH, kW = kernel_size
    xp = jnp.pad(x, ((0, 0), (0, 0),
                     (padding[0], padding[0]), (padding[1], padding[1])))
    Hout = (H + 2 * padding[0] - dilation[0] * (kH - 1) - 1) // stride[0] + 1
    Wout = (W + 2 * padding[1] - dilation[1] * (kW - 1) - 1) // stride[1] + 1
    cols = []
    for kh in range(kH):
        for kw in range(kW):
            h0 = kh * dilation[0]
            w0 = kw * dilation[1]
            sl = xp[:, :,
                    h0:h0 + stride[0] * (Hout - 1) + 1:stride[0],
                    w0:w0 + stride[1] * (Wout - 1) + 1:stride[1]]
            cols.append(sl)                              # [N, C, Hout, Wout]
    patches = jnp.stack(cols, axis=2)                    # [N, C, kH*kW, Ho, Wo]
    patches = patches.transpose(0, 3, 4, 1, 2)           # [N, Ho, Wo, C, kH*kW]
    return patches.reshape(N * Hout * Wout, C * kH * kW), Hout, Wout


def selfonn2d_forward(x, weight, bias, *, q, stride, padding, dilation,
                      groups=1, tile_m=512, mxu_dtype=None):
    """Self-ONN 2D forward (fast mode, zeros padding, no dropout).

    x:      [N, Cin, H, W]        (NCHW, matches PyTorch)
    weight: [Cout, q*Cin//groups, kH, kW]
    bias:   [Cout] or None
    mxu_dtype: None keeps full-precision matmul operands;
               jnp.bfloat16 recommended on v6e/v7x (powers stay f32).
    returns [N, Cout, Hout, Wout]
    """
    assert groups == 1, "groups > 1 not implemented"  # TODO(synk): grouped Self-ONN
    N, Cin, H, W = x.shape
    Cout = weight.shape[0]
    kH, kW = weight.shape[2], weight.shape[3]
    k0 = Cin * kH * kW

    patches, Hout, Wout = _im2col(x, (kH, kW), stride, padding, dilation)
    M = patches.shape[0]

    # Row tile: large tiles amortize the ~0.35us per-grid-step overhead and the
    # resident weight DMA, but keep >= 2 grid steps when there is enough work
    # so both v7x TensorCores get a "parallel" step.
    tile_m = max(LANE, (int(tile_m) // LANE) * LANE)
    while tile_m > LANE and M <= tile_m:
        tile_m = max(LANE, tile_m // 2)
    M_pad = pl.cdiv(M, tile_m) * tile_m
    if M_pad != M:
        patches = jnp.pad(patches, ((0, M_pad - M), (0, 0)))

    # Weight (Cout, q*Cin, kH, kW) -> (q*K0, Cout_pad); zero-pad the output dim
    # to a multiple of 128 so kernel stores are lane-dense (no masked vst).
    Cout_pad = pl.cdiv(Cout, LANE) * LANE
    w2 = weight.reshape(Cout, q * k0).T                       # (q*K0, Cout)
    b1 = bias if bias is not None else jnp.zeros((Cout,), weight.dtype)
    if Cout_pad != Cout:
        w2 = jnp.pad(w2, ((0, 0), (0, Cout_pad - Cout)))
        b1 = jnp.pad(b1, ((0, Cout_pad - Cout),))
    if mxu_dtype is not None:
        w2 = w2.astype(mxu_dtype)                             # halve weight DMA
    b2 = b1.reshape(1, Cout_pad)

    grid = (M_pad // tile_m,)

    # VMEM budget: double-buffered patch + output tiles, (double-buffered)
    # resident weight, plus f32 in-kernel intermediates (powers, concat, acc).
    x_isz = jnp.dtype(x.dtype).itemsize
    w_isz = jnp.dtype(w2.dtype).itemsize
    est_vmem = (2 * tile_m * k0 * x_isz
                + 2 * tile_m * Cout_pad * x_isz
                + 2 * q * k0 * Cout_pad * w_isz
                + tile_m * (2 * q * k0 + Cout_pad) * 4)
    # >= 32 MiB lifts v5e's 16 MiB scoped default; 48 MiB cap stays safely
    # inside v7x's 64 MiB physical VMEM.
    vmem_limit = int(min(48 << 20, max(32 << 20, 2 * est_vmem)))

    flops = 2 * M_pad * (q * k0) * Cout_pad + (q - 1) * M_pad * k0
    bytes_accessed = (patches.size * x_isz + w2.size * w_isz
                      + b2.size * jnp.dtype(b2.dtype).itemsize
                      + M_pad * Cout_pad * x_isz)

    out = pl.pallas_call(
        partial(_selfonn_kernel, q=q, mxu_dtype=mxu_dtype),
        out_shape=jax.ShapeDtypeStruct((M_pad, Cout_pad), x.dtype),
        grid_spec=pltpu.PrefetchScalarGridSpec(
            num_scalar_prefetch=0,
            grid=grid,
            in_specs=[
                pl.BlockSpec((tile_m, k0), lambda i: (i, 0)),
                pl.BlockSpec((q * k0, Cout_pad), lambda i: (0, 0)),
                pl.BlockSpec((1, Cout_pad), lambda i: (0, 0)),
            ],
            out_specs=pl.BlockSpec((tile_m, Cout_pad), lambda i: (i, 0)),
        ),
        compiler_params=pltpu.CompilerParams(
            dimension_semantics=("parallel",),
            vmem_limit_bytes=vmem_limit),
        cost_estimate=pl.CostEstimate(
            flops=flops, transcendentals=0, bytes_accessed=bytes_accessed),
    )(patches, w2, b2)

    out = out[:M, :Cout]                                       # drop padding
    # TODO(synk): keep NHWC downstream to drop this extra HBM transpose pass;
    # PyTorch parity requires NCHW here.
    out = out.reshape(N, Hout, Wout, Cout).transpose(0, 3, 1, 2)
    return out


# -------------------------- parameter init (deterministic) ------------------ #
def init_params(key, in_channels, out_channels, kernel_size, q, use_bias=True,
                dtype=jnp.float32):
    kH, kW = kernel_size
    wshape = (out_channels, q * in_channels, kH, kW)
    # xavier_uniform_ with tanh gain, matching reset_parameters()
    gain = 5.0 / 3.0
    fan_in = q * in_channels * kH * kW
    fan_out = out_channels * kH * kW
    bound_w = gain * math.sqrt(6.0 / (fan_in + fan_out))
    kw_key, kb_key = jax.random.split(key)
    weight = jax.random.uniform(kw_key, wshape, dtype,
                                minval=-bound_w, maxval=bound_w)
    bias = None
    if use_bias:
        bound_b = 1.0 / math.sqrt(fan_in)
        bias = jax.random.uniform(kb_key, (out_channels,), dtype,
                                  minval=-bound_b, maxval=bound_b)
    return weight, bias


# ------------------------------ reference (pure JAX) ------------------------ #
def selfonn2d_reference(x, weight, bias, *, q, stride, padding, dilation):
    xq = jnp.concatenate([x ** (i + 1) for i in range(q)], axis=1)
    y = jax.lax.conv_general_dilated(
        xq, weight,
        window_strides=stride,
        padding=[(padding[0], padding[0]), (padding[1], padding[1])],
        rhs_dilation=dilation,
        dimension_numbers=("NCHW", "OIHW", "NCHW"))
    if bias is not None:
        y = y + bias.reshape(1, -1, 1, 1)
    return y


if __name__ == "__main__":
    # Small SelfONN2d config: Cin=4, Cout=8, k=3x3, stride=1, pad=1, q=3, bias.
    N, Cin, H, W = 2, 4, 16, 16
    Cout, q = 8, 3
    kernel_size = (3, 3)
    stride = (1, 1)
    padding = (1, 1)
    dilation = (1, 1)

    key = jax.random.PRNGKey(0)
    kx, kp = jax.random.split(key)
    x = jax.random.normal(kx, (N, Cin, H, W), jnp.float32)
    weight, bias = init_params(kp, Cin, Cout, kernel_size, q, use_bias=True)

    y = selfonn2d_forward(x, weight, bias, q=q, stride=stride,
                          padding=padding, dilation=dilation)
    y = jax.block_until_ready(y)

    y_ref = selfonn2d_reference(x, weight, bias, q=q, stride=stride,
                                padding=padding, dilation=dilation)
    assert y.shape == (N, Cout, H, W), y.shape
    assert jnp.allclose(y, y_ref, atol=1e-4, rtol=1e-4), \
        float(jnp.max(jnp.abs(y - y_ref)))

    print("KERNEL_OK")
</pallas_src>

<mosaic_0001>
module attributes {stable_mosaic.version = 11 : i64} {
  func.func @_selfonn_kernel(%arg0: i32, %arg1: memref<256x36xf32, #tpu.memory_space<vmem>>, %arg2: memref<108x128xf32, #tpu.memory_space<vmem>>, %arg3: memref<1x128xf32, #tpu.memory_space<vmem>>, %arg4: memref<256x128xf32, #tpu.memory_space<vmem>>) attributes {dimension_semantics = [#tpu.dimension_semantics<parallel>], iteration_bounds = array<i64: 2>, scalar_prefetch = 0 : i64, scratch_operands = 0 : i64, tpu.core_type = #tpu.core_type<tc>, window_params = [{transform_indices = @transform_0, window_bounds = array<i64: 256, 36>}, {pipeline_mode = #tpu.pipeline_mode<synchronous>, transform_indices = @transform_1, window_bounds = array<i64: 108, 128>}, {pipeline_mode = #tpu.pipeline_mode<synchronous>, transform_indices = @transform_2, window_bounds = array<i64: 1, 128>}, {transform_indices = @transform_3, window_bounds = array<i64: 256, 128>}]} {
    %c0 = arith.constant 0 : index
    %c0_0 = arith.constant 0 : index
    %0 = vector.load %arg1[%c0, %c0_0] : memref<256x36xf32, #tpu.memory_space<vmem>>, vector<256x36xf32>
    %1 = arith.mulf %0, %0 : vector<256x36xf32>
    %2 = arith.mulf %1, %0 : vector<256x36xf32>
    %3 = tpu.concatenate %0, %1, %2 in 1 : vector<256x36xf32>, vector<256x36xf32>, vector<256x36xf32> -> vector<256x108xf32>
    %c0_1 = arith.constant 0 : index
    %c0_2 = arith.constant 0 : index
    %4 = vector.load %arg2[%c0_1, %c0_2] : memref<108x128xf32, #tpu.memory_space<vmem>>, vector<108x128xf32>
    %cst = arith.constant dense<0.000000e+00> : vector<256x128xf32>
    %5 = tpu.matmul %3, %4, %cst {dimension_numbers = #tpu.dot_dimension_numbers<[1], [0], [0], [1], [0, 0, 1, 1], [], []>} : vector<256x108xf32>, vector<108x128xf32>, vector<256x128xf32> -> vector<256x128xf32>
    %c0_3 = arith.constant 0 : index
    %c0_4 = arith.constant 0 : index
    %6 = vector.load %arg3[%c0_3, %c0_4] : memref<1x128xf32, #tpu.memory_space<vmem>>, vector<1x128xf32>
    %7 = vector.broadcast %6 : vector<1x128xf32> to vector<256x128xf32>
    %8 = arith.addf %5, %7 : vector<256x128xf32>
    %c0_5 = arith.constant 0 : index
    %c0_6 = arith.constant 0 : index
    %9 = vector.load %arg4[%c0_5, %c0_6] : memref<256x128xf32, #tpu.memory_space<vmem>>, vector<256x128xf32>
    tpu.vector_store %arg4[%c0_5, %c0_6], %8 {strides = array<i32>} : memref<256x128xf32, #tpu.memory_space<vmem>>, vector<256x128xf32>,
    return
  }
  func.func @transform_0(%arg0: i32) -> (i32, i32) {
    %c0_i32 = arith.constant 0 : i32
    %c0_i32_0 = arith.constant 0 : i32
    return %arg0, %c0_i32 : i32, i32
  }
  func.func @transform_1(%arg0: i32) -> (i32, i32) {
    %c0_i32 = arith.constant 0 : i32
    %c0_i32_0 = arith.constant 0 : i32
    %c0_i32_1 = arith.constant 0 : i32
    return %c0_i32, %c0_i32_0 : i32, i32
  }
  func.func @transform_2(%arg0: i32) -> (i32, i32) {
    %c0_i32 = arith.constant 0 : i32
    %c0_i32_0 = arith.constant 0 : i32
    %c0_i32_1 = arith.constant 0 : i32
    return %c0_i32, %c0_i32_0 : i32, i32
  }
  func.func @transform_3(%arg0: i32) -> (i32, i32) {
    %c0_i32 = arith.constant 0 : i32
    %c0_i32_0 = arith.constant 0 : i32
    return %arg0, %c0_i32 : i32, i32
  }
}

</mosaic_0001>

<llo_original>
// kernel: tpu_custom_call.1
$region0: #{tpu_custom_call.1}
  #allocation0 [shape = 'u32[]', space=smem, size = 0x4, offset = 0x4, fixed_abs, tag = 'smem constant byte address 0x4 - core index']
  #allocation1 [shape = 'u32[144,128]{1,0:T(1,128)}', space=vmem, size = 0x12000, scoped, tag = 'internal scratch']
  %s0 = inlined_call_operand.vmem [shape: f32[512,36], index: 0, kind: input, shape index: {}]
  %s1 = inlined_call_operand.vmem [shape: f32[108,128], index: 1, kind: input, shape index: {}]
  %s2 = inlined_call_operand.vmem [shape: f32[1,128], index: 2, kind: input, shape index: {}]
  %s3 = inlined_call_operand.hbm [shape: f32[512,128], index: 3, kind: output, shape index: {}]
  %s4 = sld [smem:[#allocation0]]
  $region45: #{tpu_custom_call.1} parent=0
    _
  %s6 = ssub.s32 1, %s4
  %s7 = scalar_select 0, %s6, %s4
  $region1: #{tpu_custom_call.1} parent=0
    #allocation2 [shape = 'u8[262144]{0}', space=vmem, size = 0x40000, scoped, tag = 'output window, operand 0']
    #allocation3 [shape = 's32[2]{0}', space=sflag, size = 0x8, scoped, tag = 'scoped memory for tpu_custom_call.1']
    %8 = vsyncpa [#allocation3], 0
    %s9 = scalar_lea.sflag [#allocation3], 1
    %10 = vsyncpa %s9, 0
    loop: start=0, step=1, limit=4
    $region2: #{tpu_custom_call.1} parent=1 // loop_pre_header
      _
    $region3: #{tpu_custom_call.1} parent=1 // loop_header
      %s12 = sphi 0, %s16
      %p13 = scmp.ge.s32.totalorder %s12, 4
      %s22 = sphi 0, %s24
      %s25 = sphi 0, %s22
      %s26 = sphi 0, %s25
      %s42 = sphi 0, %s26
      %s46 = sphi 0, %s46
      %s48 = sphi 0, %s46
      %s49 = sphi 0, %s48
      %s63 = sphi 0, %s49
      %s67 = sphi 0, %s67
      %s69 = sphi 0, %s67
      %s70 = sphi 0, %s69
      %s84 = sphi 0, %s70
      %s90 = sphi 0, %s92
      %s93 = sphi 0, %s90
      %s94 = sphi 0, %s93
      %s110 = sphi 0, %s94
    $region4: #{tpu_custom_call.1} parent=1 // loop_header_branch
      %15 = sbr.rel (%p13) target = $region8
    $region5: #{tpu_custom_call.1} parent=1 // loop_body
      %s17 = ssub.s32 %s12, 1
      %s18 = ssub.s32 %s12, 2
      %s19 = sadd.s32 %s12, 1
      %s20 = ssub.s32 %s12, %s19
      %p21 = scmp.eq.s32.totalorder %s20, 0
      %s23 = sadd.s32 %s22, 1
      %s24 = scalar_select %p21, %s22, %s23
      %p27 = pneg %p21
      %p28 = scmp.eq.s32.totalorder %s12, 1
      %p29 = por %p27, %p28
      %p30 = scmp.ne.s32.totalorder %s22, %s25
      %p31 = scmp.eq.s32.totalorder %s12, 0
      %p32 = por %p30, %p31
      %p33 = scmp.ne.s32.totalorder %s22, %s25
      %p34 = scmp.eq.s32.totalorder %s17, 1
      %p35 = por %p33, %p34
      %p36 = scmp.ne.s32.totalorder %s25, %s26
      %p37 = scmp.eq.s32.totalorder %s17, 0
      %p38 = por %p36, %p37
      %p39 = scmp.ne.s32.totalorder %s25, %s26
      %p40 = scmp.eq.s32.totalorder %s18, 1
      %p41 = por %p39, %p40
      %p43 = scmp.ne.s32.totalorder %s26, %s42
      %p44 = scmp.eq.s32.totalorder %s18, 0
      %p45 = por %p43, %p44
      %s47 = sadd.s32 %s46, 1
      %p50 = scmp.eq.s32.totalorder %s12, 1
      %p51 = scmp.ne.s32.totalorder %s46, %s48
      %p52 = scmp.eq.s32.totalorder %s12, 0
      %p53 = por %p51, %p52
      %p54 = scmp.ne.s32.totalorder %s46, %s48
      %p55 = scmp.eq.s32.totalorder %s17, 1
      %p56 = por %p54, %p55
      %p57 = scmp.ne.s32.totalorder %s48, %s49
      %p58 = scmp.eq.s32.totalorder %s17, 0
      %p59 = por %p57, %p58
      %p60 = scmp.ne.s32.totalorder %s48, %s49
      %p61 = scmp.eq.s32.totalorder %s18, 1
      %p62 = por %p60, %p61
      %p64 = scmp.ne.s32.totalorder %s49, %s63
      %p65 = scmp.eq.s32.totalorder %s18, 0
      %p66 = por %p64, %p65
      %s68 = sadd.s32 %s67, 1
      %p71 = scmp.eq.s32.totalorder %s12, 1
      %p72 = scmp.ne.s32.totalorder %s67, %s69
      %p73 = scmp.eq.s32.totalorder %s12, 0
      %p74 = por %p72, %p73
      %p75 = scmp.ne.s32.totalorder %s67, %s69
      %p76 = scmp.eq.s32.totalorder %s17, 1
      %p77 = por %p75, %p76
      %p78 = scmp.ne.s32.totalorder %s69, %s70
      %p79 = scmp.eq.s32.totalorder %s17, 0
      %p80 = por %p78, %p79
      %p81 = scmp.ne.s32.totalorder %s69, %s70
      %p82 = scmp.eq.s32.totalorder %s18, 1
      %p83 = por %p81, %p82
      %p85 = scmp.ne.s32.totalorder %s70, %s84
      %p86 = scmp.eq.s32.totalorder %s18, 0
      %p87 = por %p85, %p86
      %s88 = ssub.s32 %s12, %s19
      %p89 = scmp.eq.s32.totalorder %s88, 0
      %s91 = sadd.s32 %s90, 1
      %s92 = scalar_select %p89, %s90, %s91
      %p95 = pneg %p89
      %p96 = scmp.eq.s32.totalorder %s12, 1
      %p97 = por %p95, %p96
      %p98 = scmp.ne.s32.totalorder %s90, %s93
      %p99 = scmp.eq.s32.totalorder %s12, 0
      %p100 = por %p98, %p99
      %p101 = scmp.ne.s32.totalorder %s90, %s93
      %p102 = scmp.eq.s32.totalorder %s17, 1
      %p103 = por %p101, %p102
      %p104 = scmp.ne.s32.totalorder %s93, %s94
      %p105 = scmp.eq.s32.totalorder %s17, 0
      %p106 = por %p104, %p105
      %p107 = scmp.ne.s32.totalorder %s93, %s94
      %p108 = scmp.eq.s32.totalorder %s18, 1
      %p109 = por %p107, %p108
      %p111 = scmp.ne.s32.totalorder %s94, %s110
      %p112 = scmp.eq.s32.totalorder %s18, 0
      %p113 = por %p111, %p112
      %p114 = scmp.le.s32.totalorder 1, %s12
      %p115 = scmp.lt.s32.totalorder %s12, 3
      %p116 = pnand %p114, %p115
      %p117 = pneg %p116
      // Predicated region
      $region9: #{tpu_custom_call.1} parent=5 // pred_check
        _
      $region10: #{tpu_custom_call.1} parent=5 // pred_check_branch
        %119 = sbr.rel (%p116) target = $region12
      $region11: #{tpu_custom_call.1} parent=5 // pred_region
        %s120 = ssub.s32 %s12, 1
        // Predicated region
        $region13: #{tpu_custom_call.1} parent=11 // pred_check
          %p121 = pneg %p59
        $region14: #{tpu_custom_call.1} parent=11 // pred_check_branch
          %123 = sbr.rel (%p121) target = $region16
        $region15: #{tpu_custom_call.1} parent=11 // pred_region
          _
        $region16: #{tpu_custom_call.1} parent=11 // pred_fallthru
          _
        // Predicated region
        $region17: #{tpu_custom_call.1} parent=11 // pred_check
          %p124 = pneg %p80
        $region18: #{tpu_custom_call.1} parent=11 // pred_check_branch
          %126 = sbr.rel (%p124) target = $region20
        $region19: #{tpu_custom_call.1} parent=11 // pred_region
          _
        $region20: #{tpu_custom_call.1} parent=11 // pred_fallthru
          _
      $region12: #{tpu_custom_call.1} parent=5 // pred_fallthru
        _
      %p127 = scmp.lt.s32.totalorder %s12, 2
      // Predicated region
      $region21: #{tpu_custom_call.1} parent=5 // pred_check
        %p128 = pneg %p127
      $region22: #{tpu_custom_call.1} parent=5 // pred_check_branch
        %130 = sbr.rel (%p128) target = $region24
      $region23: #{tpu_custom_call.1} parent=5 // pred_region
        // Predicated region
        $region25: #{tpu_custom_call.1} parent=23 // pred_check
          %p131 = pneg %p32
        $region26: #{tpu_custom_call.1} parent=23 // pred_check_branch
          %133 = sbr.rel (%p131) target = $region28
        $region27: #{tpu_custom_call.1} parent=23 // pred_region
          %s134 = smul.u32 32, %s12
          %p135 = scmp.lt.s32.totalorder %s134, 63
          %s136 = scalar_select %p135, %s134, 63
          %s137 = smul.addr %s136, 8
          %s138 = scalar_lea.vmem %s0, %s137
          %s139 = smul.u32 32, %s12
        $region28: #{tpu_custom_call.1} parent=23 // pred_fallthru
          _
      $region24: #{tpu_custom_call.1} parent=5 // pred_fallthru
        _
      %p140 = scmp.le.s32.totalorder 1, %s12
      %p141 = scmp.lt.s32.totalorder %s12, 3
      %p142 = pnand %p140, %p141
      %p143 = pneg %p142
      // Predicated region
      $region29: #{tpu_custom_call.1} parent=5 // pred_check
        _
      $region30: #{tpu_custom_call.1} parent=5 // pred_check_branch
        %145 = sbr.rel (%p142) target = $region32
      $region31: #{tpu_custom_call.1} parent=5 // pred_region
        %s146 = ssub.s32 %s12, 1
        %s147 = smul.u32 32, %s17
        %p148 = scmp.lt.s32.totalorder %s147, 63
        %s149 = scalar_select %p148, %s147, 63
        %s150 = smul.addr %s149, 8
        %s151 = scalar_lea.vmem %s0, %s150
        %p152 = pneg %p38
        %p153 = pneg %p35
        %p154 = pneg %p59
        %p155 = pneg %p56
        %p156 = pneg %p80
        %p157 = pneg %p77
        %p158 = pneg %p106
        %p159 = pneg %p103
        %s160 = sand.u32 %s93, 1
        %s161 = scalar_lea.sflag [#allocation3], %s160
        %s162 = sand.u32 %s93, 1
        %s163 = smul.addr %s162, 256
        %s164 = scalar_lea.vmem [#allocation2], %s163
        %s165 = smul.u32 32, %s17
        %p166 = scmp.lt.s32.totalorder %s165, 63
        %s167 = scalar_select %p166, %s165, 63
        %s168 = smul.addr %s167, 8
        %s169 = scalar_lea.vmem %s0, %s168
        %s170 = smul.u32 32, %s17
        %s171 = smul.u32 32, %s17
        %v172 = vld [vmem:[%s169] sm:$0xff]
        %v173 = vld [vmem:[%s169 + $0x8] sm:$0xff]
        %v174 = vld [vmem:[%s169 + $0x10] sm:$0xff]
        %v175 = vld [vmem:[%s169 + $0x18] sm:$0xff]
        %v176 = vld [vmem:[%s169 + $0x20] sm:$0xff]
        %v177 = vld [vmem:[%s169 + $0x28] sm:$0xff]
        %v178 = vld [vmem:[%s169 + $0x30] sm:$0xff]
        %v179 = vld [vmem:[%s169 + $0x38] sm:$0xff]
        %v180 = vld [vmem:[%s169 + $0x40] sm:$0xff]
        %v181 = vld [vmem:[%s169 + $0x48] sm:$0xff]
        %v182 = vld [vmem:[%s169 + $0x50] sm:$0xff]
        %v183 = vld [vmem:[%s169 + $0x58] sm:$0xff]
        %v184 = vld [vmem:[%s169 + $0x60] sm:$0xff]
        %v185 = vld [vmem:[%s169 + $0x68] sm:$0xff]
        %v186 = vld [vmem:[%s169 + $0x70] sm:$0xff]
        %v187 = vld [vmem:[%s169 + $0x78] sm:$0xff]
        %v188 = vld [vmem:[%s169 + $0x80] sm:$0xff]
        %v189 = vld [vmem:[%s169 + $0x88] sm:$0xff]
        %v190 = vld [vmem:[%s169 + $0x90] sm:$0xff]
        %v191 = vld [vmem:[%s169 + $0x98] sm:$0xff]
        %v192 = vld [vmem:[%s169 + $0xa0] sm:$0xff]
        %v193 = vld [vmem:[%s169 + $0xa8] sm:$0xff]
        %v194 = vld [vmem:[%s169 + $0xb0] sm:$0xff]
        %v195 = vld [vmem:[%s169 + $0xb8] sm:$0xff]
        %v196 = vld [vmem:[%s169 + $0xc0] sm:$0xff]
        %v197 = vld [vmem:[%s169 + $0xc8] sm:$0xff]
        %v198 = vld [vmem:[%s169 + $0xd0] sm:$0xff]
        %v199 = vld [vmem:[%s169 + $0xd8] sm:$0xff]
        %v200 = vld [vmem:[%s169 + $0xe0] sm:$0xff]
        %v201 = vld [vmem:[%s169 + $0xe8] sm:$0xff]
        %v202 = vld [vmem:[%s169 + $0xf0] sm:$0xff]
        %v203 = vld [vmem:[%s169 + $0xf8] sm:$0xff]
        %v204 = vmul.f32 %v172, %v172
        %v205 = vmul.f32 %v173, %v173
        %v206 = vmul.f32 %v174, %v174
        %v207 = vmul.f32 %v175, %v175
        %v208 = vmul.f32 %v176, %v176
        %v209 = vmul.f32 %v177, %v177
        %v210 = vmul.f32 %v178, %v178
        %v211 = vmul.f32 %v179, %v179
        %v212 = vmul.f32 %v180, %v180
        %v213 = vmul.f32 %v181, %v181
        %v214 = vmul.f32 %v182, %v182
        %v215 = vmul.f32 %v183, %v183
        %v216 = vmul.f32 %v184, %v184
        %v217 = vmul.f32 %v185, %v185
        %v218 = vmul.f32 %v186, %v186
        %v219 = vmul.f32 %v187, %v187
        %v220 = vmul.f32 %v188, %v188
        %v221 = vmul.f32 %v189, %v189
        %v222 = vmul.f32 %v190, %v190
        %v223 = vmul.f32 %v191, %v191
        %v224 = vmul.f32 %v192, %v192
        %v225 = vmul.f32 %v193, %v193
        %v226 = vmul.f32 %v194, %v194
        %v227 = vmul.f32 %v195, %v195
        %v228 = vmul.f32 %v196, %v196
        %v229 = vmul.f32 %v197, %v197
        %v230 = vmul.f32 %v198, %v198
        %v231 = vmul.f32 %v199, %v199
        %v232 = vmul.f32 %v200, %v200
        %v233 = vmul.f32 %v201, %v201
        %v234 = vmul.f32 %v202, %v202
        %v235 = vmul.f32 %v203, %v203
        %v236 = vmul.f32 %v204, %v172
        %v237 = vmul.f32 %v205, %v173
        %v238 = vmul.f32 %v206, %v174
        %v239 = vmul.f32 %v207, %v175
        %v240 = vmul.f32 %v208, %v176
        %v241 = vmul.f32 %v209, %v177
        %v242 = vmul.f32 %v210, %v178
        %v243 = vmul.f32 %v211, %v179
        %v244 = vmul.f32 %v212, %v180
        %v245 = vmul.f32 %v213, %v181
        %v246 = vmul.f32 %v214, %v182
        %v247 = vmul.f32 %v215, %v183
        %v248 = vmul.f32 %v216, %v184
        %v249 = vmul.f32 %v217, %v185
        %v250 = vmul.f32 %v218, %v186
        %v251 = vmul.f32 %v219, %v187
        %v252 = vmul.f32 %v220, %v188
        %v253 = vmul.f32 %v221, %v189
        %v254 = vmul.f32 %v222, %v190
        %v255 = vmul.f32 %v223, %v191
        %v256 = vmul.f32 %v224, %v192
        %v257 = vmul.f32 %v225, %v193
        %v258 = vmul.f32 %v226, %v194
        %v259 = vmul.f32 %v227, %v195
        %v260 = vmul.f32 %v228, %v196
        %v261 = vmul.f32 %v229, %v197
        %v262 = vmul.f32 %v230, %v198
        %v263 = vmul.f32 %v231, %v199
        %v264 = vmul.f32 %v232, %v200
        %v265 = vmul.f32 %v233, %v201
        %v266 = vmul.f32 %v234, %v202
        %v267 = vmul.f32 %v235, %v203
        %300 = vrot.lane.b32.xlu0 %v204, 36
        %v301 = vpop.permute.xlu0 %300
        %302 = vrot.lane.b32.xlu0 %v205, 36
        %v303 = vpop.permute.xlu0 %302
        %304 = vrot.lane.b32.xlu0 %v206, 36
        %v305 = vpop.permute.xlu0 %304
        %306 = vrot.lane.b32.xlu0 %v207, 36
        %v307 = vpop.permute.xlu0 %306
        %308 = vrot.lane.b32.xlu0 %v208, 36
        %v309 = vpop.permute.xlu0 %308
        %310 = vrot.lane.b32.xlu0 %v209, 36
        %v311 = vpop.permute.xlu0 %310
        %312 = vrot.lane.b32.xlu0 %v210, 36
        %v313 = vpop.permute.xlu0 %312
        %314 = vrot.lane.b32.xlu0 %v211, 36
        %v315 = vpop.permute.xlu0 %314
        %316 = vrot.lane.b32.xlu0 %v212, 36
        %v317 = vpop.permute.xlu0 %316
        %318 = vrot.lane.b32.xlu0 %v213, 36
        %v319 = vpop.permute.xlu0 %318
        %320 = vrot.lane.b32.xlu0 %v214, 36
        %v321 = vpop.permute.xlu0 %320
        %322 = vrot.lane.b32.xlu0 %v215, 36
        %v323 = vpop.permute.xlu0 %322
        %324 = vrot.lane.b32.xlu0 %v216, 36
        %v325 = vpop.permute.xlu0 %324
        %326 = vrot.lane.b32.xlu0 %v217, 36
        %v327 = vpop.permute.xlu0 %326
        %328 = vrot.lane.b32.xlu0 %v218, 36
        %v329 = vpop.permute.xlu0 %328
        %330 = vrot.lane.b32.xlu0 %v219, 36
        %v331 = vpop.permute.xlu0 %330
        %332 = vrot.lane.b32.xlu0 %v220, 36
        %v333 = vpop.permute.xlu0 %332
        %334 = vrot.lane.b32.xlu0 %v221, 36
        %v335 = vpop.permute.xlu0 %334
        %336 = vrot.lane.b32.xlu0 %v222, 36
        %v337 = vpop.permute.xlu0 %336
        %338 = vrot.lane.b32.xlu0 %v223, 36
        %v339 = vpop.permute.xlu0 %338
        %340 = vrot.lane.b32.xlu0 %v224, 36
        %v341 = vpop.permute.xlu0 %340
        %342 = vrot.lane.b32.xlu0 %v225, 36
        %v343 = vpop.permute.xlu0 %342
        %344 = vrot.lane.b32.xlu0 %v226, 36
        %v345 = vpop.permute.xlu0 %344
        %346 = vrot.lane.b32.xlu0 %v227, 36
        %v347 = vpop.permute.xlu0 %346
        %348 = vrot.lane.b32.xlu0 %v228, 36
        %v349 = vpop.permute.xlu0 %348
        %350 = vrot.lane.b32.xlu0 %v229, 36
        %v351 = vpop.permute.xlu0 %350
        %352 = vrot.lane.b32.xlu0 %v230, 36
        %v353 = vpop.permute.xlu0 %352
        %354 = vrot.lane.b32.xlu0 %v231, 36
        %v355 = vpop.permute.xlu0 %354
        %356 = vrot.lane.b32.xlu0 %v232, 36
        %v357 = vpop.permute.xlu0 %356
        %358 = vrot.lane.b32.xlu0 %v233, 36
        %v359 = vpop.permute.xlu0 %358
        %360 = vrot.lane.b32.xlu0 %v234, 36
        %v361 = vpop.permute.xlu0 %360
        %362 = vrot.lane.b32.xlu0 %v235, 36
        %v363 = vpop.permute.xlu0 %362
        %428 = vrot.lane.b32.xlu0 %v236, 72
        %v429 = vpop.permute.xlu0 %428
        %430 = vrot.lane.b32.xlu0 %v237, 72
        %v431 = vpop.permute.xlu0 %430
        %432 = vrot.lane.b32.xlu0 %v238, 72
        %v433 = vpop.permute.xlu0 %432
        %434 = vrot.lane.b32.xlu0 %v239, 72
        %v435 = vpop.permute.xlu0 %434
        %436 = vrot.lane.b32.xlu0 %v240, 72
        %v437 = vpop.permute.xlu0 %436
        %438 = vrot.lane.b32.xlu0 %v241, 72
        %v439 = vpop.permute.xlu0 %438
        %440 = vrot.lane.b32.xlu0 %v242, 72
        %v441 = vpop.permute.xlu0 %440
        %442 = vrot.lane.b32.xlu0 %v243, 72
        %v443 = vpop.permute.xlu0 %442
        %444 = vrot.lane.b32.xlu0 %v244, 72
        %v445 = vpop.permute.xlu0 %444
        %446 = vrot.lane.b32.xlu0 %v245, 72
        %v447 = vpop.permute.xlu0 %446
        %448 = vrot.lane.b32.xlu0 %v246, 72
        %v449 = vpop.permute.xlu0 %448
        %450 = vrot.lane.b32.xlu0 %v247, 72
        %v451 = vpop.permute.xlu0 %450
        %452 = vrot.lane.b32.xlu0 %v248, 72
        %v453 = vpop.permute.xlu0 %452
        %454 = vrot.lane.b32.xlu0 %v249, 72
        %v455 = vpop.permute.xlu0 %454
        %456 = vrot.lane.b32.xlu0 %v250, 72
        %v457 = vpop.permute.xlu0 %456
        %458 = vrot.lane.b32.xlu0 %v251, 72
        %v459 = vpop.permute.xlu0 %458
        %460 = vrot.lane.b32.xlu0 %v252, 72
        %v461 = vpop.permute.xlu0 %460
        %462 = vrot.lane.b32.xlu0 %v253, 72
        %v463 = vpop.permute.xlu0 %462
        %464 = vrot.lane.b32.xlu0 %v254, 72
        %v465 = vpop.permute.xlu0 %464
        %466 = vrot.lane.b32.xlu0 %v255, 72
        %v467 = vpop.permute.xlu0 %466
        %468 = vrot.lane.b32.xlu0 %v256, 72
        %v469 = vpop.permute.xlu0 %468
        %470 = vrot.lane.b32.xlu0 %v257, 72
        %v471 = vpop.permute.xlu0 %470
        %472 = vrot.lane.b32.xlu0 %v258, 72
        %v473 = vpop.permute.xlu0 %472
        %474 = vrot.lane.b32.xlu0 %v259, 72
        %v475 = vpop.permute.xlu0 %474
        %476 = vrot.lane.b32.xlu0 %v260, 72
        %v477 = vpop.permute.xlu0 %476
        %478 = vrot.lane.b32.xlu0 %v261, 72
        %v479 = vpop.permute.xlu0 %478
        %480 = vrot.lane.b32.xlu0 %v262, 72
        %v481 = vpop.permute.xlu0 %480
        %482 = vrot.lane.b32.xlu0 %v263, 72
        %v483 = vpop.permute.xlu0 %482
        %484 = vrot.lane.b32.xlu0 %v264, 72
        %v485 = vpop.permute.xlu0 %484
        %486 = vrot.lane.b32.xlu0 %v265, 72
        %v487 = vpop.permute.xlu0 %486
        %488 = vrot.lane.b32.xlu0 %v266, 72
        %v489 = vpop.permute.xlu0 %488
        %490 = vrot.lane.b32.xlu0 %v267, 72
        %v491 = vpop.permute.xlu0 %490
        %vm524 = vcmask 293888
        %v525 = vsel %vm524, %v172, %v301
        %v526 = vsel %vm524, %v173, %v303
        %v527 = vsel %vm524, %v174, %v305
        %v528 = vsel %vm524, %v175, %v307
        %v529 = vsel %vm524, %v176, %v309
        %v530 = vsel %vm524, %v177, %v311
        %v531 = vsel %vm524, %v178, %v313
        %v532 = vsel %vm524, %v179, %v315
        %v533 = vsel %vm524, %v180, %v317
        %v534 = vsel %vm524, %v181, %v319
        %v535 = vsel %vm524, %v182, %v321
        %v536 = vsel %vm524, %v183, %v323
        %v537 = vsel %vm524, %v184, %v325
        %v538 = vsel %vm524, %v185, %v327
        %v539 = vsel %vm524, %v186, %v329
        %v540 = vsel %vm524, %v187, %v331
        %v541 = vsel %vm524, %v188, %v333
        %v542 = vsel %vm524, %v189, %v335
        %v543 = vsel %vm524, %v190, %v337
        %v544 = vsel %vm524, %v191, %v339
        %v545 = vsel %vm524, %v192, %v341
        %v546 = vsel %vm524, %v193, %v343
        %v547 = vsel %vm524, %v194, %v345
        %v548 = vsel %vm524, %v195, %v347
        %v549 = vsel %vm524, %v196, %v349
        %v550 = vsel %vm524, %v197, %v351
        %v551 = vsel %vm524, %v198, %v353
        %v552 = vsel %vm524, %v199, %v355
        %v553 = vsel %vm524, %v200, %v357
        %v554 = vsel %vm524, %v201, %v359
        %v555 = vsel %vm524, %v202, %v361
        %v556 = vsel %vm524, %v203, %v363
        %vm557 = vcmask 588800
        %v558 = vsel %vm557, %v525, %v429
        %v559 = vsel %vm557, %v526, %v431
        %v560 = vsel %vm557, %v527, %v433
        %v561 = vsel %vm557, %v528, %v435
        %v562 = vsel %vm557, %v529, %v437
        %v563 = vsel %vm557, %v530, %v439
        %v564 = vsel %vm557, %v531, %v441
        %v565 = vsel %vm557, %v532, %v443
        %v566 = vsel %vm557, %v533, %v445
        %v567 = vsel %vm557, %v534, %v447
        %v568 = vsel %vm557, %v535, %v449
        %v569 = vsel %vm557, %v536, %v451
        %v570 = vsel %vm557, %v537, %v453
        %v571 = vsel %vm557, %v538, %v455
        %v572 = vsel %vm557, %v539, %v457
        %v573 = vsel %vm557, %v540, %v459
        %v574 = vsel %vm557, %v541, %v461
        %v575 = vsel %vm557, %v542, %v463
        %v576 = vsel %vm557, %v543, %v465
        %v577 = vsel %vm557, %v544, %v467
        %v578 = vsel %vm557, %v545, %v469
        %v579 = vsel %vm557, %v546, %v471
        %v580 = vsel %vm557, %v547, %v473
        %v581 = vsel %vm557, %v548, %v475
        %v582 = vsel %vm557, %v549, %v477
        %v583 = vsel %vm557, %v550, %v479
        %v584 = vsel %vm557, %v551, %v481
        %v585 = vsel %vm557, %v552, %v483
        %v586 = vsel %vm557, %v553, %v485
        %v587 = vsel %vm557, %v554, %v487
        %v588 = vsel %vm557, %v555, %v489
        %v589 = vsel %vm557, %v556, %v491
        %v590 = vld [vmem:[%s1] sm:$0xff]
        %v591 = vld [vmem:[%s1 + $0x8] sm:$0xff]
        %v592 = vld [vmem:[%s1 + $0x10] sm:$0xff]
        %v593 = vld [vmem:[%s1 + $0x18] sm:$0xff]
        %v594 = vld [vmem:[%s1 + $0x20] sm:$0xff]
        %v595 = vld [vmem:[%s1 + $0x28] sm:$0xff]
        %v596 = vld [vmem:[%s1 + $0x30] sm:$0xff]
        %v597 = vld [vmem:[%s1 + $0x38] sm:$0xff]
        %v598 = vld [vmem:[%s1 + $0x40] sm:$0xff]
        %v599 = vld [vmem:[%s1 + $0x48] sm:$0xff]
        %v600 = vld [vmem:[%s1 + $0x50] sm:$0xff]
        %v601 = vld [vmem:[%s1 + $0x58] sm:$0xff]
        %v602 = vld [vmem:[%s1 + $0x60] sm:$0xff]
        %v603 = vld [vmem:[%s1 + $0x68] sm:$0xf]
        %v604 = vld [vmem:[%s2] sm:$0x1]
        %v606 = vlaneseq
        %v607 = vshrl.u32 %v606, 7
        %v608 = vsub.s32 0, %v607
        %v609 = vrot.slane %v604, %v608
        %vm611 = vcmask 883712
        %v613 = vsel %vm611, %v558, 0
        %v616 = vsel %vm611, %v559, 0
        %v619 = vsel %vm611, %v560, 0
        %v622 = vsel %vm611, %v561, 0
        %v625 = vsel %vm611, %v562, 0
        %v628 = vsel %vm611, %v563, 0
        %v631 = vsel %vm611, %v564, 0
        %v634 = vsel %vm611, %v565, 0
        %v637 = vsel %vm611, %v566, 0
        %v640 = vsel %vm611, %v567, 0
        %v643 = vsel %vm611, %v568, 0
        %v646 = vsel %vm611, %v569, 0
        %v649 = vsel %vm611, %v570, 0
        %v652 = vsel %vm611, %v571, 0
        %v655 = vsel %vm611, %v572, 0
        %v658 = vsel %vm611, %v573, 0
        %v661 = vsel %vm611, %v574, 0
        %v664 = vsel %vm611, %v575, 0
        %v667 = vsel %vm611, %v576, 0
        %v670 = vsel %vm611, %v577, 0
        %v673 = vsel %vm611, %v578, 0
        %v676 = vsel %vm611, %v579, 0
        %v679 = vsel %vm611, %v580, 0
        %v682 = vsel %vm611, %v581, 0
        %v685 = vsel %vm611, %v582, 0
        %v688 = vsel %vm611, %v583, 0
        %v691 = vsel %vm611, %v584, 0
        %v694 = vsel %vm611, %v585, 0
        %v697 = vsel %vm611, %v586, 0
        %v700 = vsel %vm611, %v587, 0
        %v703 = vsel %vm611, %v588, 0
        %v706 = vsel %vm611, %v589, 0
        %vm708 = vcmask 1043456
        %v710 = vsel %vm708, %v603, 0
        %712 = vmatprep.subr.mxu0 0.0
        %713 = vmatpush1.msra.mxu0 0.0
        %714 = vmatprep.subr.mxu0 0.0
        %715 = vmatpush1.msra.mxu0 0.0
        %716 = vmatprep.subr.mxu0 0.0
        %717 = vmatpush1.msra.mxu0 %v710
        %718 = vmatprep.subr.mxu0 0.0
        %719 = vmatpush1.msra.mxu0 %v602
        %720 = vmatprep.subr.mxu0 0.0
        %721 = vmatpush1.msra.mxu0 %v601
        %722 = vmatprep.subr.mxu0 0.0
        %723 = vmatpush1.msra.mxu0 %v600
        %724 = vmatprep.subr.mxu0 0.0
        %725 = vmatpush1.msra.mxu0 %v599
        %726 = vmatprep.subr.mxu0 0.0
        %727 = vmatpush1.msra.mxu0 %v598
        %728 = vmatprep.subr.mxu0 0.0
        %729 = vmatpush1.msra.mxu0 %v597
        %730 = vmatprep.subr.mxu0 0.0
        %731 = vmatpush1.msra.mxu0 %v596
        %732 = vmatprep.subr.mxu0 0.0
        %733 = vmatpush1.msra.mxu0 %v595
        %734 = vmatprep.subr.mxu0 0.0
        %735 = vmatpush1.msra.mxu0 %v594
        %736 = vmatprep.subr.mxu0 0.0
        %737 = vmatpush1.msra.mxu0 %v593
        %738 = vmatprep.subr.mxu0 0.0
        %739 = vmatpush1.msra.mxu0 %v592
        %740 = vmatprep.subr.mxu0 0.0
        %741 = vmatpush1.msra.mxu0 %v591
        %742 = vmatprep.subr.mxu0 0.0
        %743 = vmatpush1.msra.mxu0 %v590
        %744 = vmatprep.subr.mxu0 0.0
        %745 = vmatpush2.msra.mxu0 0.0
        %746 = vmatprep.subr.mxu0 0.0
        %747 = vmatpush2.msra.mxu0 0.0
        %748 = vmatprep.subr.mxu0 0.0
        %749 = vmatpush2.msra.mxu0 0.0
        %750 = vmatprep.subr.mxu0 0.0
        %751 = vmatpush2.msra.mxu0 0.0
        %752 = vmatprep.subr.mxu0 0.0
        %753 = vmatpush2.msra.mxu0 0.0
        %754 = vmatprep.subr.mxu0 0.0
        %755 = vmatpush2.msra.mxu0 0.0
        %756 = vmatprep.subr.mxu0 0.0
        %757 = vmatpush2.msra.mxu0 0.0
        %758 = vmatprep.subr.mxu0 0.0
        %759 = vmatpush2.msra.mxu0 0.0
        %760 = vmatprep.subr.mxu0 0.0
        %761 = vmatpush2.msra.mxu0 0.0
        %762 = vmatprep.subr.mxu0 0.0
        %763 = vmatpush2.msra.mxu0 0.0
        %764 = vmatprep.subr.mxu0 0.0
        %765 = vmatpush2.msra.mxu0 0.0
        %766 = vmatprep.subr.mxu0 0.0
        %767 = vmatpush2.msra.mxu0 0.0
        %768 = vmatprep.subr.mxu0 0.0
        %769 = vmatpush2.msra.mxu0 0.0
        %770 = vmatprep.subr.mxu0 0.0
        %771 = vmatpush2.msra.mxu0 0.0
        %772 = vmatprep.subr.mxu0 0.0
        %773 = vmatpush2.msra.mxu0 0.0
        %774 = vmatprep.subr.mxu0 0.0
        %775 = vmatpush2.msra.mxu0 0.0
        %776 = vmatprep.mubr.f32.mxu0 0.0
        %777 = vmatmul.mubr.f32.gmra.mxu0 %v613
        %v778 = vpop.f32.mrf.mxu0
        %v779 = vadd.f32 %v609, %v778
        %v780 = vpop.f32.mrf.mxu0
        %781 = vmatprep.mubr.f32.mxu0 0.0
        %782 = vmatmul.mubr.f32.gmra.mxu0 %v616
        %v783 = vpop.f32.mrf.mxu0
        %v784 = vadd.f32 %v609, %v783
        %v785 = vpop.f32.mrf.mxu0
        %786 = vmatprep.mubr.f32.mxu0 0.0
        %787 = vmatmul.mubr.f32.gmra.mxu0 %v619
        %v788 = vpop.f32.mrf.mxu0
        %v789 = vadd.f32 %v609, %v788
        %v790 = vpop.f32.mrf.mxu0
        %791 = vmatprep.mubr.f32.mxu0 0.0
        %792 = vmatmul.mubr.f32.gmra.mxu0 %v622
        %v793 = vpop.f32.mrf.mxu0
        %v794 = vadd.f32 %v609, %v793
        %v795 = vpop.f32.mrf.mxu0
        %796 = vmatprep.mubr.f32.mxu0 0.0
        %797 = vmatmul.mubr.f32.gmra.mxu0 %v625
        %v798 = vpop.f32.mrf.mxu0
        %v799 = vadd.f32 %v609, %v798
        %v800 = vpop.f32.mrf.mxu0
        %801 = vmatprep.mubr.f32.mxu0 0.0
        %802 = vmatmul.mubr.f32.gmra.mxu0 %v628
        %v803 = vpop.f32.mrf.mxu0
        %v804 = vadd.f32 %v609, %v803
        %v805 = vpop.f32.mrf.mxu0
        %806 = vmatprep.mubr.f32.mxu0 0.0
        %807 = vmatmul.mubr.f32.gmra.mxu0 %v631
        %v808 = vpop.f32.mrf.mxu0
        %v809 = vadd.f32 %v609, %v808
        %v810 = vpop.f32.mrf.mxu0
        %811 = vmatprep.mubr.f32.mxu0 0.0
        %812 = vmatmul.mubr.f32.gmra.mxu0 %v634
        %v813 = vpop.f32.mrf.mxu0
        %v814 = vadd.f32 %v609, %v813
        %v815 = vpop.f32.mrf.mxu0
        %816 = vmatprep.mubr.f32.mxu0 0.0
        %817 = vmatmul.mubr.f32.gmra.mxu0 %v637
        %v818 = vpop.f32.mrf.mxu0
        %v819 = vadd.f32 %v609, %v818
        %v820 = vpop.f32.mrf.mxu0
        %821 = vmatprep.mubr.f32.mxu0 0.0
        %822 = vmatmul.mubr.f32.gmra.mxu0 %v640
        %v823 = vpop.f32.mrf.mxu0
        %v824 = vadd.f32 %v609, %v823
        %v825 = vpop.f32.mrf.mxu0
        %826 = vmatprep.mubr.f32.mxu0 0.0
        %827 = vmatmul.mubr.f32.gmra.mxu0 %v643
        %v828 = vpop.f32.mrf.mxu0
        %v829 = vadd.f32 %v609, %v828
        %v830 = vpop.f32.mrf.mxu0
        %831 = vmatprep.mubr.f32.mxu0 0.0
        %832 = vmatmul.mubr.f32.gmra.mxu0 %v646
        %v833 = vpop.f32.mrf.mxu0
        %v834 = vadd.f32 %v609, %v833
        %v835 = vpop.f32.mrf.mxu0
        %836 = vmatprep.mubr.f32.mxu0 0.0
        %837 = vmatmul.mubr.f32.gmra.mxu0 %v649
        %v838 = vpop.f32.mrf.mxu0
        %v839 = vadd.f32 %v609, %v838
        %v840 = vpop.f32.mrf.mxu0
        %841 = vmatprep.mubr.f32.mxu0 0.0
        %842 = vmatmul.mubr.f32.gmra.mxu0 %v652
        %v843 = vpop.f32.mrf.mxu0
        %v844 = vadd.f32 %v609, %v843
        %v845 = vpop.f32.mrf.mxu0
        %846 = vmatprep.mubr.f32.mxu0 0.0
        %847 = vmatmul.mubr.f32.gmra.mxu0 %v655
        %v848 = vpop.f32.mrf.mxu0
        %v849 = vadd.f32 %v609, %v848
        %v850 = vpop.f32.mrf.mxu0
        %851 = vmatprep.mubr.f32.mxu0 0.0
        %852 = vmatmul.mubr.f32.gmra.mxu0 %v658
        %v853 = vpop.f32.mrf.mxu0
        %v854 = vadd.f32 %v609, %v853
        %v855 = vpop.f32.mrf.mxu0
        %856 = vmatprep.mubr.f32.mxu0 0.0
        %857 = vmatmul.mubr.f32.gmra.mxu0 %v661
        %v858 = vpop.f32.mrf.mxu0
        %v859 = vadd.f32 %v609, %v858
        %v860 = vpop.f32.mrf.mxu0
        %861 = vmatprep.mubr.f32.mxu0 0.0
        %862 = vmatmul.mubr.f32.gmra.mxu0 %v664
        %v863 = vpop.f32.mrf.mxu0
        %v864 = vadd.f32 %v609, %v863
        %v865 = vpop.f32.mrf.mxu0
        %866 = vmatprep.mubr.f32.mxu0 0.0
        %867 = vmatmul.mubr.f32.gmra.mxu0 %v667
        %v868 = vpop.f32.mrf.mxu0
        %v869 = vadd.f32 %v609, %v868
        %v870 = vpop.f32.mrf.mxu0
        %871 = vmatprep.mubr.f32.mxu0 0.0
        %872 = vmatmul.mubr.f32.gmra.mxu0 %v670
        %v873 = vpop.f32.mrf.mxu0
        %v874 = vadd.f32 %v609, %v873
        %v875 = vpop.f32.mrf.mxu0
        %876 = vmatprep.mubr.f32.mxu0 0.0
        %877 = vmatmul.mubr.f32.gmra.mxu0 %v673
        %v878 = vpop.f32.mrf.mxu0
        %v879 = vadd.f32 %v609, %v878
        %v880 = vpop.f32.mrf.mxu0
        %881 = vmatprep.mubr.f32.mxu0 0.0
        %882 = vmatmul.mubr.f32.gmra.mxu0 %v676
        %v883 = vpop.f32.mrf.mxu0
        %v884 = vadd.f32 %v609, %v883
        %v885 = vpop.f32.mrf.mxu0
        %886 = vmatprep.mubr.f32.mxu0 0.0
        %887 = vmatmul.mubr.f32.gmra.mxu0 %v679
        %v888 = vpop.f32.mrf.mxu0
        %v889 = vadd.f32 %v609, %v888
        %v890 = vpop.f32.mrf.mxu0
        %891 = vmatprep.mubr.f32.mxu0 0.0
        %892 = vmatmul.mubr.f32.gmra.mxu0 %v682
        %v893 = vpop.f32.mrf.mxu0
        %v894 = vadd.f32 %v609, %v893
        %v895 = vpop.f32.mrf.mxu0
        %896 = vmatprep.mubr.f32.mxu0 0.0
        %897 = vmatmul.mubr.f32.gmra.mxu0 %v685
        %v898 = vpop.f32.mrf.mxu0
        %v899 = vadd.f32 %v609, %v898
        %v900 = vpop.f32.mrf.mxu0
        %901 = vmatprep.mubr.f32.mxu0 0.0
        %902 = vmatmul.mubr.f32.gmra.mxu0 %v688
        %v903 = vpop.f32.mrf.mxu0
        %v904 = vadd.f32 %v609, %v903
        %v905 = vpop.f32.mrf.mxu0
        %906 = vmatprep.mubr.f32.mxu0 0.0
        %907 = vmatmul.mubr.f32.gmra.mxu0 %v691
        %v908 = vpop.f32.mrf.mxu0
        %v909 = vadd.f32 %v609, %v908
        %v910 = vpop.f32.mrf.mxu0
        %911 = vmatprep.mubr.f32.mxu0 0.0
        %912 = vmatmul.mubr.f32.gmra.mxu0 %v694
        %v913 = vpop.f32.mrf.mxu0
        %v914 = vadd.f32 %v609, %v913
        %v915 = vpop.f32.mrf.mxu0
        %916 = vmatprep.mubr.f32.mxu0 0.0
        %917 = vmatmul.mubr.f32.gmra.mxu0 %v697
        %v918 = vpop.f32.mrf.mxu0
        %v919 = vadd.f32 %v609, %v918
        %v920 = vpop.f32.mrf.mxu0
        %921 = vmatprep.mubr.f32.mxu0 0.0
        %922 = vmatmul.mubr.f32.gmra.mxu0 %v700
        %v923 = vpop.f32.mrf.mxu0
        %v924 = vadd.f32 %v609, %v923
        %v925 = vpop.f32.mrf.mxu0
        %926 = vmatprep.mubr.f32.mxu0 0.0
        %927 = vmatmul.mubr.f32.gmra.mxu0 %v703
        %v928 = vpop.f32.mrf.mxu0
        %v929 = vadd.f32 %v609, %v928
        %v930 = vpop.f32.mrf.mxu0
        %931 = vmatprep.mubr.f32.mxu0 0.0
        %932 = vmatmul.mubr.f32.gmra.mxu0 %v706
        %v933 = vpop.f32.mrf.mxu0
        %v934 = vadd.f32 %v609, %v933
        %v935 = vpop.f32.mrf.mxu0
        %936 = vdwg.mxu0
        %937 = vst [vmem:[%s164] sm:$0xff] %v779
        %938 = vst [vmem:[%s164 + $0x8] sm:$0xff] %v784
        %939 = vst [vmem:[%s164 + $0x10] sm:$0xff] %v789
        %940 = vst [vmem:[%s164 + $0x18] sm:$0xff] %v794
        %941 = vst [vmem:[%s164 + $0x20] sm:$0xff] %v799
        %942 = vst [vmem:[%s164 + $0x28] sm:$0xff] %v804
        %943 = vst [vmem:[%s164 + $0x30] sm:$0xff] %v809
        %944 = vst [vmem:[%s164 + $0x38] sm:$0xff] %v814
        %945 = vst [vmem:[%s164 + $0x40] sm:$0xff] %v819
        %946 = vst [vmem:[%s164 + $0x48] sm:$0xff] %v824
        %947 = vst [vmem:[%s164 + $0x50] sm:$0xff] %v829
        %948 = vst [vmem:[%s164 + $0x58] sm:$0xff] %v834
        %949 = vst [vmem:[%s164 + $0x60] sm:$0xff] %v839
        %950 = vst [vmem:[%s164 + $0x68] sm:$0xff] %v844
        %951 = vst [vmem:[%s164 + $0x70] sm:$0xff] %v849
        %952 = vst [vmem:[%s164 + $0x78] sm:$0xff] %v854
        %953 = vst [vmem:[%s164 + $0x80] sm:$0xff] %v859
        %954 = vst [vmem:[%s164 + $0x88] sm:$0xff] %v864
        %955 = vst [vmem:[%s164 + $0x90] sm:$0xff] %v869
        %956 = vst [vmem:[%s164 + $0x98] sm:$0xff] %v874
        %957 = vst [vmem:[%s164 + $0xa0] sm:$0xff] %v879
        %958 = vst [vmem:[%s164 + $0xa8] sm:$0xff] %v884
        %959 = vst [vmem:[%s164 + $0xb0] sm:$0xff] %v889
        %960 = vst [vmem:[%s164 + $0xb8] sm:$0xff] %v894
        %961 = vst [vmem:[%s164 + $0xc0] sm:$0xff] %v899
        %962 = vst [vmem:[%s164 + $0xc8] sm:$0xff] %v904
        %963 = vst [vmem:[%s164 + $0xd0] sm:$0xff] %v909
        %964 = vst [vmem:[%s164 + $0xd8] sm:$0xff] %v914
        %965 = vst [vmem:[%s164 + $0xe0] sm:$0xff] %v919
        %966 = vst [vmem:[%s164 + $0xe8] sm:$0xff] %v924
        %967 = vst [vmem:[%s164 + $0xf0] sm:$0xff] %v929
        %968 = vst [vmem:[%s164 + $0xf8] sm:$0xff] %v934
        %s969 = sand.u32 %s93, 1
        %s970 = scalar_lea.sflag [#allocation3], %s969
        %s971 = sand.u32 %s93, 1
        %s972 = smul.addr %s971, 256
        %s973 = scalar_lea.vmem [#allocation2], %s972
        // Predicated region
        $region33: #{tpu_custom_call.1} parent=31 // pred_check
          %p974 = pneg %p103
        $region34: #{tpu_custom_call.1} parent=31 // pred_check_branch
          %976 = sbr.rel (%p974) target = $region36
        $region35: #{tpu_custom_call.1} parent=31 // pred_region
          %s977 = smul.u32 32, %s17
          %s979 = ssub.s32 4096, 4096
          %980 = vsyncadd %s970, %s979
          %s981 = smul.addr %s977, 128
          %s982 = scalar_lea.hbm %s3, %s981
          %s983 = sshll.u32 %s973, 4
          %s984 = int_to_ptr.vmem [resolvable:$true] %s983
          %989 = dma.vmem_to_hbm [thread:$0]  %s984, 4096, %s982, %s970, 128, 128, 8
        $region36: #{tpu_custom_call.1} parent=31 // pred_fallthru
          _
      $region32: #{tpu_custom_call.1} parent=5 // pred_fallthru
        _
      %p990 = scmp.le.s32.totalorder 2, %s12
      // Predicated region
      $region37: #{tpu_custom_call.1} parent=5 // pred_check
        %p991 = pneg %p990
      $region38: #{tpu_custom_call.1} parent=5 // pred_check_branch
        %993 = sbr.rel (%p991) target = $region40
      $region39: #{tpu_custom_call.1} parent=5 // pred_region
        %s994 = ssub.s32 %s12, 2
        // Predicated region
        $region41: #{tpu_custom_call.1} parent=39 // pred_check
          %p995 = pneg %p109
        $region42: #{tpu_custom_call.1} parent=39 // pred_check_branch
          %997 = sbr.rel (%p995) target = $region44
        $region43: #{tpu_custom_call.1} parent=39 // pred_region
          %s998 = sand.u32 %s94, 1
          %s999 = scalar_lea.sflag [#allocation3], %s998
          %s1000 = sand.u32 %s94, 1
          %s1001 = smul.addr %s1000, 256
          %s1002 = scalar_lea.vmem [#allocation2], %s1001
          %1003 = dma.done %s999, 4096
        $region44: #{tpu_custom_call.1} parent=39 // pred_fallthru
          _
      $region40: #{tpu_custom_call.1} parent=5 // pred_fallthru
        _
    $region6: #{tpu_custom_call.1} parent=1 // loop_footer
      %s16 = sadd.s32 1, %s12
    $region7: #{tpu_custom_call.1} parent=1 // loop_footer_branch
      %11 = sbr.rel target = $region3
    $region8: #{tpu_custom_call.1} parent=1 // loop_exit
      _
    %1004 = vsyncpa [#allocation3], 1
    %s1005 = scalar_lea.sflag [#allocation3], 1
    %1006 = vsyncpa %s1005, 1

</llo_original>
